<compile_context>
chip_gen: v6e
topology: v6e:2x2x1
jax: 0.10.0
libtpu: 0.0.40
codegen_flags: <defaults>
</compile_context>

<pallas_src>
import functools

import jax
import jax.numpy as jnp
import numpy as np
from jax.experimental import pallas as pl
from jax.experimental.pallas import tpu as pltpu

BN_EPS = 1e-5

_LANE = 128      # lane width: pad K / Cout to multiples of this
_SUBLANE = 16    # bf16 sublane packing: keep row tiles multiples of 16


def _round_up(x, m):
    return (x + m - 1) // m * m


def _vmem_params():
    """Generation-aware (vmem_budget, vmem_limit_bytes, row_tile_cap)."""
    vmem_cap = 64 * 1024 * 1024              # conservative fallback (v7x)
    try:
        vmem_cap = int(pltpu.get_tpu_info().vmem_capacity_bytes)
    except Exception:
        pass
    if vmem_cap >= 100 * 1024 * 1024:        # v5e / v6e: 128 MiB VMEM
        return 96 * 1024 * 1024, 100 * 1024 * 1024, 1024
    # v7x: 64 MiB physical VMEM -> stay conservative.
    return 36 * 1024 * 1024, 44 * 1024 * 1024, 512


# ----------------------------------------------------------------------------
# Pallas kernels: fused conv-as-matmul + BN affine (scale/bias, f32 epilogue)
# (+ optional residual) + optional ReLU.  bf16 MXU operands, f32 accumulate,
# configurable output dtype (bf16 for the inter-conv activation, f32 at the
# block boundary).
# ----------------------------------------------------------------------------
def _mm_kernel(x_ref, w_ref, s_ref, b_ref, o_ref, *, apply_relu):
    y = jnp.dot(x_ref[...], w_ref[...], preferred_element_type=jnp.float32)
    y = y * s_ref[...] + b_ref[...]
    if apply_relu:
        y = jnp.maximum(y, 0.0)
    o_ref[...] = y.astype(o_ref.dtype)


def _mm_res_kernel(x_ref, w_ref, s_ref, b_ref, r_ref, o_ref, *, apply_relu):
    y = jnp.dot(x_ref[...], w_ref[...], preferred_element_type=jnp.float32)
    y = y * s_ref[...] + b_ref[...] + r_ref[...].astype(jnp.float32)
    if apply_relu:
        y = jnp.maximum(y, 0.0)
    o_ref[...] = y.astype(o_ref.dtype)


def _choose_tm(m, kp, cp, has_res, out_bytes, budget, cap):
    """Largest row tile (multiple of 16, <= cap) fitting the VMEM budget,
    forced to give >= 2 grid steps so both v7x TensorCores get work."""
    tm = min(cap, _round_up(m, _SUBLANE))
    if _round_up(m, tm) // tm < 2 and m > _SUBLANE:
        tm = max(_SUBLANE, _round_up((m + 1) // 2, _SUBLANE))

    def vmem_bytes(t):
        per_step = t * kp * 2 + t * cp * out_bytes      # x tile (bf16) + out
        if has_res:
            per_step += t * cp * 2                      # residual tile (bf16)
        resident = kp * cp * 2 + 2 * cp * 4             # weight (bf16) + scale/bias
        # TODO(synk): count residents once when pipeline_mode=pl.Buffered(1)
        # is enabled; double-buffered accounting kept here to be conservative.
        return 2 * (per_step + resident)

    while tm > _SUBLANE and vmem_bytes(tm) > budget:
        tm = _round_up(tm // 2, _SUBLANE)
    return tm


def fused_conv_matmul(x, w, scale, bias, *, residual=None, apply_relu=True,
                      out_dtype=jnp.float32):
    """out = relu?( (x @ w) * scale + bias [+ residual] ).

    x: (M, K) patches (bf16 preferred; f32 gets padded+cast once),
    w: (K, C) raw weight, scale/bias: (C,) f32 BN affine (f32 epilogue).
    Returns the *padded* (Mp, Cp) result so callers can carry the lane-padded
    channel layout between convolutions without slice/re-pad round trips.
    """
    M, K = x.shape
    Kw, C = w.shape
    assert Kw == K
    has_res = residual is not None

    Kp = _round_up(K, _LANE)
    Cp = _round_up(C, _LANE)
    out_bytes = jnp.dtype(out_dtype).itemsize

    budget, vmem_limit, cap = _vmem_params()
    tm = _choose_tm(M, Kp, Cp, has_res, out_bytes, budget, cap)
    Mp = _round_up(M, tm)

    # Only touch the big patch tensor if it actually needs padding / casting
    # (conv2's patches arrive bf16 and lane-aligned -> zero extra passes).
    xp = x
    if xp.dtype != jnp.bfloat16 or Mp != M or Kp != K:
        xp = jnp.pad(x, ((0, Mp - M), (0, Kp - K))).astype(jnp.bfloat16)
    wp = jnp.pad(w, ((0, Kp - K), (0, Cp - C))).astype(jnp.bfloat16)
    sp = jnp.pad(scale.astype(jnp.float32).reshape(1, -1), ((0, 0), (0, Cp - C)))
    bp = jnp.pad(bias.astype(jnp.float32).reshape(1, -1), ((0, 0), (0, Cp - C)))

    inputs = [xp, wp, sp, bp]
    in_specs = [
        pl.BlockSpec((tm, Kp), lambda i: (i, 0)),   # patch tile (pipelined)
        pl.BlockSpec((Kp, Cp), lambda i: (0, 0)),   # weight (resident)
        pl.BlockSpec((1, Cp), lambda i: (0, 0)),    # BN scale
        pl.BlockSpec((1, Cp), lambda i: (0, 0)),    # BN bias
    ]
    flops = 2 * Mp * Kp * Cp
    bytes_accessed = (xp.size * 2 + wp.size * 2 + sp.size * 4 + bp.size * 4
                      + Mp * Cp * out_bytes)

    if has_res:
        Mr, Cr = residual.shape
        rp = residual
        if rp.dtype != jnp.bfloat16 or Mr != Mp or Cr != Cp:
            rp = jnp.pad(residual,
                         ((0, Mp - Mr), (0, Cp - Cr))).astype(jnp.bfloat16)
        inputs.append(rp)
        in_specs.append(pl.BlockSpec((tm, Cp), lambda i: (i, 0)))
        kernel = functools.partial(_mm_res_kernel, apply_relu=apply_relu)
        bytes_accessed += rp.size * 2
    else:
        kernel = functools.partial(_mm_kernel, apply_relu=apply_relu)

    out = pl.pallas_call(
        kernel,
        out_shape=jax.ShapeDtypeStruct((Mp, Cp), out_dtype),
        grid_spec=pltpu.PrefetchScalarGridSpec(
            num_scalar_prefetch=0,
            grid=(Mp // tm,),
            in_specs=in_specs,
            out_specs=pl.BlockSpec((tm, Cp), lambda i: (i, 0)),
        ),
        compiler_params=pltpu.CompilerParams(
            dimension_semantics=("parallel",),
            vmem_limit_bytes=vmem_limit),
        cost_estimate=pl.CostEstimate(
            flops=flops, transcendentals=0, bytes_accessed=bytes_accessed),
    )(*inputs)
    return out   # padded (Mp, Cp)


# ----------------------------------------------------------------------------
# Glue: im2col, weight reshaping, BN scale/bias
# ----------------------------------------------------------------------------
def im2col(x_nhwc, ksize, stride, padding, extra_cols=None):
    """(N,H,W,C) -> patches (N*Ho*Wo, ksize*ksize*C [+ extra]); feature order
    kh,kw,C.  `extra_cols` (N,Ho,Wo,Ce) is appended inside the same
    concatenate (used to fuse the 1x1 projection-shortcut tap for free)."""
    N, H, W, C = x_nhwc.shape
    xp = jnp.pad(x_nhwc,
                 ((0, 0), (padding, padding), (padding, padding), (0, 0)))
    Ho = (H + 2 * padding - ksize) // stride + 1
    Wo = (W + 2 * padding - ksize) // stride + 1
    cols = []
    for kh in range(ksize):
        for kw in range(ksize):
            cols.append(xp[:, kh:kh + Ho * stride:stride,
                           kw:kw + Wo * stride:stride, :])
    if extra_cols is not None:
        cols.append(extra_cols)
    patches = jnp.concatenate(cols, axis=-1)
    return patches.reshape(N * Ho * Wo, -1), (N, Ho, Wo)


def conv_weight_matrix(w_oihw, cin_p):
    """(Cout,Cin,kh,kw) -> (kh*kw*cin_p, Cout); per-tap input channels are
    zero-padded to cin_p so the rows match lane-padded im2col features."""
    cout, cin, kh, kw = w_oihw.shape
    w = jnp.transpose(w_oihw, (2, 3, 1, 0))          # (kh, kw, cin, cout)
    w = jnp.pad(w, ((0, 0), (0, 0), (0, cin_p - cin), (0, 0)))
    return w.reshape(kh * kw * cin_p, cout)


def bn_scale_bias(bn):
    """Eval-mode BN as per-channel (scale, bias)."""
    scale = bn["gamma"] * jax.lax.rsqrt(bn["var"] + BN_EPS)
    return scale, bn["beta"] - bn["mean"] * scale


# ----------------------------------------------------------------------------
# BasicBlock forward (Pallas-backed)
# ----------------------------------------------------------------------------
def basic_block_forward(x_nchw, params, stride):
    x = jnp.transpose(x_nchw, (0, 2, 3, 1)).astype(jnp.float32)   # NHWC
    N, H, W, Cin = x.shape
    Cout = params["w1"].shape[0]
    Cp = _round_up(Cout, _LANE)

    # conv1 (3x3, stride) + bn1 + relu -> bf16, channels carried padded to Cp.
    p1, (_, ho, wo) = im2col(x, 3, stride, 1)
    s1, b1 = bn_scale_bias(params["bn1"])
    w1m = conv_weight_matrix(params["w1"], Cin)
    out1 = fused_conv_matmul(p1, w1m, s1, b1, apply_relu=True,
                             out_dtype=jnp.bfloat16)
    m1 = N * ho * wo
    out1_nhwc = out1[:m1].reshape(N, ho, wo, Cp)     # row slice only if padded

    # conv2 (3x3, stride 1) + bn2 + shortcut + relu  (single fused kernel).
    s2, b2 = bn_scale_bias(params["bn2"])

    if stride != 1 or Cin != Cout:
        # Projection shortcut fused into conv2's single MXU dot: 1x1 strided
        # tap appended to the im2col concatenate, weights stacked along K
        # (each branch's BN scale folded into its own f32 weight block).
        ssc, bsc = bn_scale_bias(params["bn_sc"])
        cin_p = _round_up(Cin, _LANE)
        xs = x[:, ::stride, ::stride, :]             # 1x1 stride-s taps
        xs = jnp.pad(xs, ((0, 0), (0, 0), (0, 0),
                          (0, cin_p - Cin))).astype(jnp.bfloat16)
        p2, _ = im2col(out1_nhwc, 3, 1, 1, extra_cols=xs)
        w2m = conv_weight_matrix(params["w2"], Cp) * s2[None, :]
        wscm = conv_weight_matrix(params["w_sc"], cin_p) * ssc[None, :]
        w_cat = jnp.concatenate([w2m, wscm], axis=0)
        out = fused_conv_matmul(p2, w_cat, jnp.ones_like(s2), b2 + bsc,
                                apply_relu=True, out_dtype=jnp.float32)
    else:
        # Identity shortcut: residual streamed as bf16, added in f32 epilogue.
        p2, _ = im2col(out1_nhwc, 3, 1, 1)
        w2m = conv_weight_matrix(params["w2"], Cp)
        res = x.reshape(N * H * W, Cin)
        out = fused_conv_matmul(p2, w2m, s2, b2, residual=res,
                                apply_relu=True, out_dtype=jnp.float32)

    m2 = N * ho * wo
    out_nhwc = out[:m2, :Cout].reshape(N, ho, wo, Cout)
    return jnp.transpose(out_nhwc, (0, 3, 1, 2))     # back to NCHW


# ----------------------------------------------------------------------------
# Pure-JAX f32 reference (NCHW convs) for correctness checking
# ----------------------------------------------------------------------------
def _conv_ref(x, w, stride, padding):
    return jax.lax.conv_general_dilated(
        x, w, (stride, stride), [(padding, padding)] * 2,
        dimension_numbers=("NCHW", "OIHW", "NCHW"))


def _bn_ref(x, bn):
    g, b, m, v = (bn[k][:, None, None] for k in ("gamma", "beta", "mean", "var"))
    return (x - m) / jnp.sqrt(v + BN_EPS) * g + b


def basic_block_ref(x, params, stride):
    out = jax.nn.relu(_bn_ref(_conv_ref(x, params["w1"], stride, 1),
                              params["bn1"]))
    out = _bn_ref(_conv_ref(out, params["w2"], 1, 1), params["bn2"])
    cin, cout = params["w1"].shape[1], params["w1"].shape[0]
    if stride != 1 or cin != cout:
        sc = _bn_ref(_conv_ref(x, params["w_sc"], stride, 0), params["bn_sc"])
    else:
        sc = x
    return jax.nn.relu(out + sc)


# ----------------------------------------------------------------------------
# Deterministic parameter init
# ----------------------------------------------------------------------------
def init_params(key, in_planes, planes, stride):
    ks = jax.random.split(key, 8)

    def bn_params(k, c):
        k1, k2, k3, k4 = jax.random.split(k, 4)
        return {
            "gamma": jax.random.uniform(k1, (c,), jnp.float32, 0.5, 1.5),
            "beta": jax.random.normal(k2, (c,), jnp.float32) * 0.1,
            "mean": jax.random.normal(k3, (c,), jnp.float32) * 0.1,
            "var": jax.random.uniform(k4, (c,), jnp.float32, 0.5, 1.5),
        }

    params = {
        "w1": jax.random.normal(ks[0], (planes, in_planes, 3, 3),
                                jnp.float32) * 0.1,
        "bn1": bn_params(ks[1], planes),
        "w2": jax.random.normal(ks[2], (planes, planes, 3, 3),
                                jnp.float32) * 0.1,
        "bn2": bn_params(ks[3], planes),
    }
    if stride != 1 or in_planes != planes:
        params["w_sc"] = jax.random.normal(
            ks[4], (planes, in_planes, 1, 1), jnp.float32) * 0.1
        params["bn_sc"] = bn_params(ks[5], planes)
    return params


if __name__ == "__main__":
    key = jax.random.PRNGKey(0)
    k1, k2, k3, k4 = jax.random.split(key, 4)

    # Case 1: batch=2, in_planes=4, planes=8, spatial=16, stride=2
    # (exercises the fused projection-shortcut / concatenated-K path).
    x_a = jax.random.normal(k1, (2, 4, 16, 16), jnp.float32)
    params_a = init_params(k2, 4, 8, 2)
    out_a = jax.block_until_ready(basic_block_forward(x_a, params_a, 2))
    ref_a = basic_block_ref(x_a, params_a, 2)
    assert out_a.shape == (2, 8, 8, 8), out_a.shape
    np.testing.assert_allclose(np.asarray(out_a), np.asarray(ref_a),
                               rtol=5e-2, atol=5e-2)

    # Case 2: stride=1, in_planes == planes (identity-residual path).
    x_b = jax.random.normal(k3, (2, 8, 16, 16), jnp.float32)
    params_b = init_params(k4, 8, 8, 1)
    out_b = jax.block_until_ready(basic_block_forward(x_b, params_b, 1))
    ref_b = basic_block_ref(x_b, params_b, 1)
    assert out_b.shape == (2, 8, 16, 16), out_b.shape
    np.testing.assert_allclose(np.asarray(out_b), np.asarray(ref_b),
                               rtol=5e-2, atol=5e-2)

    print("KERNEL_OK")
</pallas_src>

<mosaic_0001>
module attributes {stable_mosaic.version = 11 : i64} {
  func.func @_mm_kernel(%arg0: i32, %arg1: memref<64x128xbf16, #tpu.memory_space<vmem>>, %arg2: memref<128x128xbf16, #tpu.memory_space<vmem>>, %arg3: memref<1x128xf32, #tpu.memory_space<vmem>>, %arg4: memref<1x128xf32, #tpu.memory_space<vmem>>, %arg5: memref<64x128xbf16, #tpu.memory_space<vmem>>) attributes {dimension_semantics = [#tpu.dimension_semantics<parallel>], iteration_bounds = array<i64: 2>, scalar_prefetch = 0 : i64, scratch_operands = 0 : i64, tpu.core_type = #tpu.core_type<tc>, window_params = [{transform_indices = @transform_0, window_bounds = array<i64: 64, 128>}, {pipeline_mode = #tpu.pipeline_mode<synchronous>, transform_indices = @transform_1, window_bounds = array<i64: 128, 128>}, {pipeline_mode = #tpu.pipeline_mode<synchronous>, transform_indices = @transform_2, window_bounds = array<i64: 1, 128>}, {pipeline_mode = #tpu.pipeline_mode<synchronous>, transform_indices = @transform_3, window_bounds = array<i64: 1, 128>}, {transform_indices = @transform_4, window_bounds = array<i64: 64, 128>}]} {
    %c0 = arith.constant 0 : index
    %c0_0 = arith.constant 0 : index
    %0 = vector.load %arg1[%c0, %c0_0] : memref<64x128xbf16, #tpu.memory_space<vmem>>, vector<64x128xbf16>
    %c0_1 = arith.constant 0 : index
    %c0_2 = arith.constant 0 : index
    %1 = vector.load %arg2[%c0_1, %c0_2] : memref<128x128xbf16, #tpu.memory_space<vmem>>, vector<128x128xbf16>
    %cst = arith.constant dense<0.000000e+00> : vector<64x128xf32>
    %2 = tpu.matmul %0, %1, %cst {dimension_numbers = #tpu.dot_dimension_numbers<[1], [0], [0], [1], [0, 0, 1, 1], [], []>} : vector<64x128xbf16>, vector<128x128xbf16>, vector<64x128xf32> -> vector<64x128xf32>
    %c0_3 = arith.constant 0 : index
    %c0_4 = arith.constant 0 : index
    %3 = vector.load %arg3[%c0_3, %c0_4] : memref<1x128xf32, #tpu.memory_space<vmem>>, vector<1x128xf32>
    %4 = vector.broadcast %3 : vector<1x128xf32> to vector<64x128xf32>
    %5 = arith.mulf %2, %4 : vector<64x128xf32>
    %c0_5 = arith.constant 0 : index
    %c0_6 = arith.constant 0 : index
    %6 = vector.load %arg4[%c0_5, %c0_6] : memref<1x128xf32, #tpu.memory_space<vmem>>, vector<1x128xf32>
    %7 = vector.broadcast %6 : vector<1x128xf32> to vector<64x128xf32>
    %8 = arith.addf %5, %7 : vector<64x128xf32>
    %cst_7 = arith.constant 0.000000e+00 : f32
    %9 = vector.broadcast %cst_7 : f32 to vector<64x128xf32>
    %10 = arith.maximumf %8, %9 : vector<64x128xf32>
    %11 = arith.truncf %10 : vector<64x128xf32> to vector<64x128xbf16>
    %c0_8 = arith.constant 0 : index
    %c0_9 = arith.constant 0 : index
    %12 = vector.load %arg5[%c0_8, %c0_9] : memref<64x128xbf16, #tpu.memory_space<vmem>>, vector<64x128xbf16>
    tpu.vector_store %arg5[%c0_8, %c0_9], %11 {strides = array<i32>} : memref<64x128xbf16, #tpu.memory_space<vmem>>, vector<64x128xbf16>,
    return
  }
  func.func @transform_0(%arg0: i32) -> (i32, i32) {
    %c0_i32 = arith.constant 0 : i32
    %c0_i32_0 = arith.constant 0 : i32
    return %arg0, %c0_i32 : i32, i32
  }
  func.func @transform_1(%arg0: i32) -> (i32, i32) {
    %c0_i32 = arith.constant 0 : i32
    %c0_i32_0 = arith.constant 0 : i32
    %c0_i32_1 = arith.constant 0 : i32
    return %c0_i32, %c0_i32_0 : i32, i32
  }
  func.func @transform_2(%arg0: i32) -> (i32, i32) {
    %c0_i32 = arith.constant 0 : i32
    %c0_i32_0 = arith.constant 0 : i32
    %c0_i32_1 = arith.constant 0 : i32
    return %c0_i32, %c0_i32_0 : i32, i32
  }
  func.func @transform_3(%arg0: i32) -> (i32, i32) {
    %c0_i32 = arith.constant 0 : i32
    %c0_i32_0 = arith.constant 0 : i32
    %c0_i32_1 = arith.constant 0 : i32
    return %c0_i32, %c0_i32_0 : i32, i32
  }
  func.func @transform_4(%arg0: i32) -> (i32, i32) {
    %c0_i32 = arith.constant 0 : i32
    %c0_i32_0 = arith.constant 0 : i32
    return %arg0, %c0_i32 : i32, i32
  }
}

</mosaic_0001>

<llo_original>
// kernel: tpu_custom_call.1
$region0: #{tpu_custom_call.1}
  #allocation0 [shape = 'u32[]', space=smem, size = 0x4, offset = 0x4, fixed_abs, tag = 'smem constant byte address 0x4 - core index']
  #allocation1 [shape = 'u32[144,128]{1,0:T(1,128)}', space=vmem, size = 0x12000, scoped, tag = 'internal scratch']
  %s0 = inlined_call_operand.hbm [shape: bf16[128,128], index: 0, kind: input, shape index: {}]
  %s1 = inlined_call_operand.hbm [shape: bf16[128,128], index: 1, kind: input, shape index: {}]
  %s2 = inlined_call_operand.vmem [shape: f32[1,128], index: 2, kind: input, shape index: {}]
  %s3 = inlined_call_operand.vmem [shape: f32[1,128], index: 3, kind: input, shape index: {}]
  %s4 = inlined_call_operand.hbm [shape: bf16[128,128], index: 4, kind: output, shape index: {}]
  %s5 = sld [smem:[#allocation0]]
  $region57: #{tpu_custom_call.1} parent=0
    _
  %s7 = ssub.s32 1, %s5
  %s8 = scalar_select 0, %s7, %s5
  $region1: #{tpu_custom_call.1} parent=0
    #allocation2 [shape = 'u8[32768]{0}', space=vmem, size = 0x8000, scoped, tag = 'input window, operand 0']
    #allocation3 [shape = 's32[2]{0}', space=sflag, size = 0x8, scoped, tag = 'scoped memory for tpu_custom_call.1']
    #allocation4 [shape = 's32[2]{0}', space=sflag, size = 0x8, scoped, tag = 'scoped memory for tpu_custom_call.1']
    #allocation5 [shape = 'u8[32768]{0}', space=vmem, size = 0x8000, scoped, tag = 'input window, operand 1, single buffered']
    #allocation6 [shape = 's32[1]{0}', space=sflag, size = 0x4, scoped, tag = 'scoped memory for tpu_custom_call.1']
    #allocation7 [shape = 'u8[32768]{0}', space=vmem, size = 0x8000, scoped, tag = 'output window, operand 0']
    %9 = vsyncpa [#allocation3], 0
    %s10 = scalar_lea.sflag [#allocation3], 1
    %11 = vsyncpa %s10, 0
    %12 = vsyncpa [#allocation6], 0
    %13 = vsyncpa [#allocation4], 0
    %s14 = scalar_lea.sflag [#allocation4], 1
    %15 = vsyncpa %s14, 0
    loop: start=0, step=1, limit=4
    $region2: #{tpu_custom_call.1} parent=1 // loop_pre_header
      _
    $region3: #{tpu_custom_call.1} parent=1 // loop_header
      %s17 = sphi 0, %s21
      %p18 = scmp.ge.s32.totalorder %s17, 4
      %s27 = sphi 0, %s29
      %s30 = sphi 0, %s27
      %s31 = sphi 0, %s30
      %s47 = sphi 0, %s31
      %s51 = sphi 0, %s51
      %s53 = sphi 0, %s51
      %s54 = sphi 0, %s53
      %s68 = sphi 0, %s54
      %s72 = sphi 0, %s72
      %s74 = sphi 0, %s72
      %s75 = sphi 0, %s74
      %s89 = sphi 0, %s75
      %s93 = sphi 0, %s93
      %s95 = sphi 0, %s93
      %s96 = sphi 0, %s95
      %s110 = sphi 0, %s96
      %s116 = sphi 0, %s118
      %s119 = sphi 0, %s116
      %s120 = sphi 0, %s119
      %s136 = sphi 0, %s120
    $region4: #{tpu_custom_call.1} parent=1 // loop_header_branch
      %20 = sbr.rel (%p18) target = $region8
    $region5: #{tpu_custom_call.1} parent=1 // loop_body
      %s22 = ssub.s32 %s17, 1
      %s23 = ssub.s32 %s17, 2
      %s24 = sadd.s32 %s17, 1
      %s25 = ssub.s32 %s17, %s24
      %p26 = scmp.eq.s32.totalorder %s25, 0
      %s28 = sadd.s32 %s27, 1
      %s29 = scalar_select %p26, %s27, %s28
      %p32 = pneg %p26
      %p33 = scmp.eq.s32.totalorder %s17, 1
      %p34 = por %p32, %p33
      %p35 = scmp.ne.s32.totalorder %s27, %s30
      %p36 = scmp.eq.s32.totalorder %s17, 0
      %p37 = por %p35, %p36
      %p38 = scmp.ne.s32.totalorder %s27, %s30
      %p39 = scmp.eq.s32.totalorder %s22, 1
      %p40 = por %p38, %p39
      %p41 = scmp.ne.s32.totalorder %s30, %s31
      %p42 = scmp.eq.s32.totalorder %s22, 0
      %p43 = por %p41, %p42
      %p44 = scmp.ne.s32.totalorder %s30, %s31
      %p45 = scmp.eq.s32.totalorder %s23, 1
      %p46 = por %p44, %p45
      %p48 = scmp.ne.s32.totalorder %s31, %s47
      %p49 = scmp.eq.s32.totalorder %s23, 0
      %p50 = por %p48, %p49
      %s52 = sadd.s32 %s51, 1
      %p55 = scmp.eq.s32.totalorder %s17, 1
      %p56 = scmp.ne.s32.totalorder %s51, %s53
      %p57 = scmp.eq.s32.totalorder %s17, 0
      %p58 = por %p56, %p57
      %p59 = scmp.ne.s32.totalorder %s51, %s53
      %p60 = scmp.eq.s32.totalorder %s22, 1
      %p61 = por %p59, %p60
      %p62 = scmp.ne.s32.totalorder %s53, %s54
      %p63 = scmp.eq.s32.totalorder %s22, 0
      %p64 = por %p62, %p63
      %p65 = scmp.ne.s32.totalorder %s53, %s54
      %p66 = scmp.eq.s32.totalorder %s23, 1
      %p67 = por %p65, %p66
      %p69 = scmp.ne.s32.totalorder %s54, %s68
      %p70 = scmp.eq.s32.totalorder %s23, 0
      %p71 = por %p69, %p70
      %s73 = sadd.s32 %s72, 1
      %p76 = scmp.eq.s32.totalorder %s17, 1
      %p77 = scmp.ne.s32.totalorder %s72, %s74
      %p78 = scmp.eq.s32.totalorder %s17, 0
      %p79 = por %p77, %p78
      %p80 = scmp.ne.s32.totalorder %s72, %s74
      %p81 = scmp.eq.s32.totalorder %s22, 1
      %p82 = por %p80, %p81
      %p83 = scmp.ne.s32.totalorder %s74, %s75
      %p84 = scmp.eq.s32.totalorder %s22, 0
      %p85 = por %p83, %p84
      %p86 = scmp.ne.s32.totalorder %s74, %s75
      %p87 = scmp.eq.s32.totalorder %s23, 1
      %p88 = por %p86, %p87
      %p90 = scmp.ne.s32.totalorder %s75, %s89
      %p91 = scmp.eq.s32.totalorder %s23, 0
      %p92 = por %p90, %p91
      %s94 = sadd.s32 %s93, 1
      %p97 = scmp.eq.s32.totalorder %s17, 1
      %p98 = scmp.ne.s32.totalorder %s93, %s95
      %p99 = scmp.eq.s32.totalorder %s17, 0
      %p100 = por %p98, %p99
      %p101 = scmp.ne.s32.totalorder %s93, %s95
      %p102 = scmp.eq.s32.totalorder %s22, 1
      %p103 = por %p101, %p102
      %p104 = scmp.ne.s32.totalorder %s95, %s96
      %p105 = scmp.eq.s32.totalorder %s22, 0
      %p106 = por %p104, %p105
      %p107 = scmp.ne.s32.totalorder %s95, %s96
      %p108 = scmp.eq.s32.totalorder %s23, 1
      %p109 = por %p107, %p108
      %p111 = scmp.ne.s32.totalorder %s96, %s110
      %p112 = scmp.eq.s32.totalorder %s23, 0
      %p113 = por %p111, %p112
      %s114 = ssub.s32 %s17, %s24
      %p115 = scmp.eq.s32.totalorder %s114, 0
      %s117 = sadd.s32 %s116, 1
      %s118 = scalar_select %p115, %s116, %s117
      %p121 = pneg %p115
      %p122 = scmp.eq.s32.totalorder %s17, 1
      %p123 = por %p121, %p122
      %p124 = scmp.ne.s32.totalorder %s116, %s119
      %p125 = scmp.eq.s32.totalorder %s17, 0
      %p126 = por %p124, %p125
      %p127 = scmp.ne.s32.totalorder %s116, %s119
      %p128 = scmp.eq.s32.totalorder %s22, 1
      %p129 = por %p127, %p128
      %p130 = scmp.ne.s32.totalorder %s119, %s120
      %p131 = scmp.eq.s32.totalorder %s22, 0
      %p132 = por %p130, %p131
      %p133 = scmp.ne.s32.totalorder %s119, %s120
      %p134 = scmp.eq.s32.totalorder %s23, 1
      %p135 = por %p133, %p134
      %p137 = scmp.ne.s32.totalorder %s120, %s136
      %p138 = scmp.eq.s32.totalorder %s23, 0
      %p139 = por %p137, %p138
      %p140 = scmp.le.s32.totalorder 1, %s17
      %p141 = scmp.lt.s32.totalorder %s17, 3
      %p142 = pnand %p140, %p141
      %p143 = pneg %p142
      // Predicated region
      $region9: #{tpu_custom_call.1} parent=5 // pred_check
        _
      $region10: #{tpu_custom_call.1} parent=5 // pred_check_branch
        %145 = sbr.rel (%p142) target = $region12
      $region11: #{tpu_custom_call.1} parent=5 // pred_region
        %s146 = ssub.s32 %s17, 1
        // Predicated region
        $region13: #{tpu_custom_call.1} parent=11 // pred_check
          %p147 = pneg %p64
        $region14: #{tpu_custom_call.1} parent=11 // pred_check_branch
          %149 = sbr.rel (%p147) target = $region16
        $region15: #{tpu_custom_call.1} parent=11 // pred_region
          %s151 = ssub.s32 1024, 1024
          %152 = vsyncadd [#allocation6], %s151
          %s153 = sshll.u32 [#allocation5], 4
          %s154 = int_to_ptr.vmem [resolvable:$true] %s153
          %159 = dma.hbm_to_vmem [thread:$0]  %s1, 1024, %s154, [#allocation6], 64, 64, 4
        $region16: #{tpu_custom_call.1} parent=11 // pred_fallthru
          _
        // Predicated region
        $region17: #{tpu_custom_call.1} parent=11 // pred_check
          %p160 = pneg %p85
        $region18: #{tpu_custom_call.1} parent=11 // pred_check_branch
          %162 = sbr.rel (%p160) target = $region20
        $region19: #{tpu_custom_call.1} parent=11 // pred_region
          _
        $region20: #{tpu_custom_call.1} parent=11 // pred_fallthru
          _
        // Predicated region
        $region21: #{tpu_custom_call.1} parent=11 // pred_check
          %p163 = pneg %p106
        $region22: #{tpu_custom_call.1} parent=11 // pred_check_branch
          %165 = sbr.rel (%p163) target = $region24
        $region23: #{tpu_custom_call.1} parent=11 // pred_region
          _
        $region24: #{tpu_custom_call.1} parent=11 // pred_fallthru
          _
      $region12: #{tpu_custom_call.1} parent=5 // pred_fallthru
        _
      %p166 = scmp.lt.s32.totalorder %s17, 2
      // Predicated region
      $region25: #{tpu_custom_call.1} parent=5 // pred_check
        %p167 = pneg %p166
      $region26: #{tpu_custom_call.1} parent=5 // pred_check_branch
        %169 = sbr.rel (%p167) target = $region28
      $region27: #{tpu_custom_call.1} parent=5 // pred_region
        // Predicated region
        $region29: #{tpu_custom_call.1} parent=27 // pred_check
          %p170 = pneg %p37
        $region30: #{tpu_custom_call.1} parent=27 // pred_check_branch
          %172 = sbr.rel (%p170) target = $region32
        $region31: #{tpu_custom_call.1} parent=27 // pred_region
          %s173 = sand.u32 %s27, 1
          %s174 = scalar_lea.sflag [#allocation3], %s173
          %s175 = sand.u32 %s27, 1
          %s176 = smul.addr %s175, 32
          %s177 = scalar_lea.vmem [#allocation2], %s176
          %s178 = smul.u32 8, %s17
          %s180 = ssub.s32 512, 512
          %181 = vsyncadd %s174, %s180
          %s182 = smul.addr %s178, 64
          %s183 = scalar_lea.hbm %s0, %s182
          %s184 = sshll.u32 %s177, 4
          %s185 = int_to_ptr.vmem [resolvable:$true] %s184
          %190 = dma.hbm_to_vmem [thread:$0]  %s183, 512, %s185, %s174, 64, 64, 4
        $region32: #{tpu_custom_call.1} parent=27 // pred_fallthru
          _
      $region28: #{tpu_custom_call.1} parent=5 // pred_fallthru
        _
      %p191 = scmp.le.s32.totalorder 1, %s17
      %p192 = scmp.lt.s32.totalorder %s17, 3
      %p193 = pnand %p191, %p192
      %p194 = pneg %p193
      // Predicated region
      $region33: #{tpu_custom_call.1} parent=5 // pred_check
        _
      $region34: #{tpu_custom_call.1} parent=5 // pred_check_branch
        %196 = sbr.rel (%p193) target = $region36
      $region35: #{tpu_custom_call.1} parent=5 // pred_region
        %s197 = ssub.s32 %s17, 1
        %s198 = sand.u32 %s30, 1
        %s199 = scalar_lea.sflag [#allocation3], %s198
        %s200 = sand.u32 %s30, 1
        %s201 = smul.addr %s200, 32
        %s202 = scalar_lea.vmem [#allocation2], %s201
        // Predicated region
        $region37: #{tpu_custom_call.1} parent=35 // pred_check
          %p203 = pneg %p43
        $region38: #{tpu_custom_call.1} parent=35 // pred_check_branch
          %205 = sbr.rel (%p203) target = $region40
        $region39: #{tpu_custom_call.1} parent=35 // pred_region
          %206 = dma.done %s199, 512
        $region40: #{tpu_custom_call.1} parent=35 // pred_fallthru
          _
        // Predicated region
        $region41: #{tpu_custom_call.1} parent=35 // pred_check
          %p207 = pneg %p64
        $region42: #{tpu_custom_call.1} parent=35 // pred_check_branch
          %209 = sbr.rel (%p207) target = $region44
        $region43: #{tpu_custom_call.1} parent=35 // pred_region
          %210 = dma.done [#allocation6], 1024
        $region44: #{tpu_custom_call.1} parent=35 // pred_fallthru
          _
        %s211 = sand.u32 %s30, 1
        %s212 = scalar_lea.sflag [#allocation3], %s211
        %s213 = sand.u32 %s30, 1
        %s214 = smul.addr %s213, 32
        %s215 = scalar_lea.vmem [#allocation2], %s214
        %p216 = pneg %p43
        %p217 = pneg %p40
        %p218 = pneg %p64
        %p219 = pneg %p61
        %p220 = pneg %p85
        %p221 = pneg %p82
        %p222 = pneg %p106
        %p223 = pneg %p103
        %p224 = pneg %p132
        %p225 = pneg %p129
        %s226 = sand.u32 %s119, 1
        %s227 = scalar_lea.sflag [#allocation4], %s226
        %s228 = sand.u32 %s119, 1
        %s229 = smul.addr %s228, 32
        %s230 = scalar_lea.vmem [#allocation7], %s229
        %s231 = smul.u32 8, %s22
        %s232 = smul.u32 8, %s22
        %v234 = vld [vmem:[%s202] sm:$0xf]
        %v235 = vld [vmem:[%s202 + $0x4] sm:$0xf]
        %v236 = vld [vmem:[%s202 + $0x8] sm:$0xf]
        %v237 = vld [vmem:[%s202 + $0xc] sm:$0xf]
        %v238 = vld [vmem:[%s202 + $0x10] sm:$0xf]
        %v239 = vld [vmem:[%s202 + $0x14] sm:$0xf]
        %v240 = vld [vmem:[%s202 + $0x18] sm:$0xf]
        %v241 = vld [vmem:[%s202 + $0x1c] sm:$0xf]
        %v242 = vld [vmem:[#allocation5] sm:$0xf]
        %v243 = vld [vmem:[#allocation5 + $0x4] sm:$0xf]
        %v244 = vld [vmem:[#allocation5 + $0x8] sm:$0xf]
        %v245 = vld [vmem:[#allocation5 + $0xc] sm:$0xf]
        %v246 = vld [vmem:[#allocation5 + $0x10] sm:$0xf]
        %v247 = vld [vmem:[#allocation5 + $0x14] sm:$0xf]
        %v248 = vld [vmem:[#allocation5 + $0x18] sm:$0xf]
        %v249 = vld [vmem:[#allocation5 + $0x1c] sm:$0xf]
        %v250 = vld [vmem:[#allocation5 + $0x20] sm:$0xf]
        %v251 = vld [vmem:[#allocation5 + $0x24] sm:$0xf]
        %v252 = vld [vmem:[#allocation5 + $0x28] sm:$0xf]
        %v253 = vld [vmem:[#allocation5 + $0x2c] sm:$0xf]
        %v254 = vld [vmem:[#allocation5 + $0x30] sm:$0xf]
        %v255 = vld [vmem:[#allocation5 + $0x34] sm:$0xf]
        %v256 = vld [vmem:[#allocation5 + $0x38] sm:$0xf]
        %v257 = vld [vmem:[#allocation5 + $0x3c] sm:$0xf]
        %v266 = vunpack.c.l.b16 %v234
        %v267 = vunpack.c.l.b16 %v235
        %v268 = vunpack.c.l.b16 %v236
        %v269 = vunpack.c.l.b16 %v237
        %v270 = vunpack.c.l.b16 %v238
        %v271 = vunpack.c.l.b16 %v239
        %v272 = vunpack.c.l.b16 %v240
        %v273 = vunpack.c.l.b16 %v241
        %v274 = vpack.c.b16 %v267, %v266
        %v275 = vpack.c.b16 %v269, %v268
        %v276 = vpack.c.b16 %v271, %v270
        %v277 = vpack.c.b16 %v273, %v272
        %v298 = vunpack.c.l.b16 %v242
        %v299 = vunpack.c.l.b16 %v243
        %v300 = vunpack.c.l.b16 %v244
        %v301 = vunpack.c.l.b16 %v245
        %v302 = vunpack.c.l.b16 %v246
        %v303 = vunpack.c.l.b16 %v247
        %v304 = vunpack.c.l.b16 %v248
        %v305 = vunpack.c.l.b16 %v249
        %v306 = vunpack.c.l.b16 %v250
        %v307 = vunpack.c.l.b16 %v251
        %v308 = vunpack.c.l.b16 %v252
        %v309 = vunpack.c.l.b16 %v253
        %v310 = vunpack.c.l.b16 %v254
        %v311 = vunpack.c.l.b16 %v255
        %v312 = vunpack.c.l.b16 %v256
        %v313 = vunpack.c.l.b16 %v257
        %v314 = vpack.c.b16 %v299, %v298
        %v315 = vpack.c.b16 %v301, %v300
        %v316 = vpack.c.b16 %v303, %v302
        %v317 = vpack.c.b16 %v305, %v304
        %v318 = vpack.c.b16 %v307, %v306
        %v319 = vpack.c.b16 %v309, %v308
        %v320 = vpack.c.b16 %v311, %v310
        %v321 = vpack.c.b16 %v313, %v312
        %330 = vmatprep.subr.bf16.mxu0 0
        %331 = vmatpush1.bf16.msra.mxu0 %v321
        %332 = vmatprep.subr.bf16.mxu0 0
        %333 = vmatpush1.bf16.msra.mxu0 %v320
        %334 = vmatprep.subr.bf16.mxu0 0
        %335 = vmatpush1.bf16.msra.mxu0 %v319
        %336 = vmatprep.subr.bf16.mxu0 0
        %337 = vmatpush1.bf16.msra.mxu0 %v318
        %338 = vmatprep.subr.bf16.mxu0 0
        %339 = vmatpush1.bf16.msra.mxu0 %v317
        %340 = vmatprep.subr.bf16.mxu0 0
        %341 = vmatpush1.bf16.msra.mxu0 %v316
        %342 = vmatprep.subr.bf16.mxu0 0
        %343 = vmatpush1.bf16.msra.mxu0 %v315
        %344 = vmatprep.subr.bf16.mxu0 0
        %345 = vmatpush1.bf16.msra.mxu0 %v314
        %346 = vmatprep.subr.bf16.mxu0 0
        %347 = vmatpush2.bf16.msra.mxu0 0
        %348 = vmatprep.subr.bf16.mxu0 0
        %349 = vmatpush2.bf16.msra.mxu0 0
        %350 = vmatprep.subr.bf16.mxu0 0
        %351 = vmatpush2.bf16.msra.mxu0 0
        %352 = vmatprep.subr.bf16.mxu0 0
        %353 = vmatpush2.bf16.msra.mxu0 0
        %354 = vmatprep.subr.bf16.mxu0 0
        %355 = vmatpush2.bf16.msra.mxu0 0
        %356 = vmatprep.subr.bf16.mxu0 0
        %357 = vmatpush2.bf16.msra.mxu0 0
        %358 = vmatprep.subr.bf16.mxu0 0
        %359 = vmatpush2.bf16.msra.mxu0 0
        %360 = vmatprep.subr.bf16.mxu0 0
        %361 = vmatpush2.bf16.msra.mxu0 0
        %362 = vmatprep.mubr.bf16.mxu0 0
        %363 = vmatmul.mubr.bf16.gmra.mxu0 %v274
        %v364 = vpop.f32.mrf.mxu0
        %v365 = vadd.f32 0.0, %v364
        %v366 = vpop.f32.mrf.mxu0
        %v367 = vpop.f32.mrf.mxu0
        %v368 = vadd.f32 0.0, %v367
        %v369 = vpop.f32.mrf.mxu0
        %370 = vmatprep.mubr.bf16.mxu0 0
        %371 = vmatmul.mubr.bf16.gmra.mxu0 %v275
        %v372 = vpop.f32.mrf.mxu0
        %v373 = vadd.f32 0.0, %v372
        %v374 = vpop.f32.mrf.mxu0
        %v375 = vpop.f32.mrf.mxu0
        %v376 = vadd.f32 0.0, %v375
        %v377 = vpop.f32.mrf.mxu0
        %378 = vmatprep.mubr.bf16.mxu0 0
        %379 = vmatmul.mubr.bf16.gmra.mxu0 %v276
        %v380 = vpop.f32.mrf.mxu0
        %v381 = vadd.f32 0.0, %v380
        %v382 = vpop.f32.mrf.mxu0
        %v383 = vpop.f32.mrf.mxu0
        %v384 = vadd.f32 0.0, %v383
        %v385 = vpop.f32.mrf.mxu0
        %386 = vmatprep.mubr.bf16.mxu0 0
        %387 = vmatmul.mubr.bf16.gmra.mxu0 %v277
        %v388 = vpop.f32.mrf.mxu0
        %v389 = vadd.f32 0.0, %v388
        %v390 = vpop.f32.mrf.mxu0
        %v391 = vpop.f32.mrf.mxu0
        %v392 = vadd.f32 0.0, %v391
        %v393 = vpop.f32.mrf.mxu0
        %394 = vdwg.mxu0
        %v395 = vld [vmem:[%s2] sm:$0x1]
        %v397 = vlaneseq
        %v398 = vshrl.u32 %v397, 7
        %v399 = vsub.s32 0, %v398
        %v400 = vrot.slane %v395, %v399
        %v402 = vmul.f32 %v365, %v400
        %v403 = vmul.f32 %v368, %v400
        %v404 = vmul.f32 %v373, %v400
        %v405 = vmul.f32 %v376, %v400
        %v406 = vmul.f32 %v381, %v400
        %v407 = vmul.f32 %v384, %v400
        %v408 = vmul.f32 %v389, %v400
        %v409 = vmul.f32 %v392, %v400
        %v410 = vld [vmem:[%s3] sm:$0x1]
        %v412 = vlaneseq
        %v413 = vshrl.u32 %v412, 7
        %v414 = vsub.s32 0, %v413
        %v415 = vrot.slane %v410, %v414
        %v417 = vadd.f32 %v402, %v415
        %v418 = vadd.f32 %v403, %v415
        %v419 = vadd.f32 %v404, %v415
        %v420 = vadd.f32 %v405, %v415
        %v421 = vadd.f32 %v406, %v415
        %v422 = vadd.f32 %v407, %v415
        %v423 = vadd.f32 %v408, %v415
        %v424 = vadd.f32 %v409, %v415
        %v425 = vmax.f32 %v417, 0.0
        %v426 = vmax.f32 %v418, 0.0
        %v427 = vmax.f32 %v419, 0.0
        %v428 = vmax.f32 %v420, 0.0
        %v429 = vmax.f32 %v421, 0.0
        %v430 = vmax.f32 %v422, 0.0
        %v431 = vmax.f32 %v423, 0.0
        %v432 = vmax.f32 %v424, 0.0
        %v433 = vpack.c.bf16 %v426, %v425
        %v434 = vpack.c.bf16 %v428, %v427
        %v435 = vpack.c.bf16 %v430, %v429
        %v436 = vpack.c.bf16 %v432, %v431
        %v441 = vunpack.c.l.b16 %v433
        %v442 = vunpack.c.h.b16 %v433
        %v443 = vunpack.c.l.b16 %v434
        %v444 = vunpack.c.h.b16 %v434
        %v445 = vunpack.c.l.b16 %v435
        %v446 = vunpack.c.h.b16 %v435
        %v447 = vunpack.c.l.b16 %v436
        %v448 = vunpack.c.h.b16 %v436
        %v449 = vpack.c.b16 %v441, %v441
        %v450 = vpack.c.b16 %v442, %v442
        %v451 = vpack.c.b16 %v443, %v443
        %v452 = vpack.c.b16 %v444, %v444
        %v453 = vpack.c.b16 %v445, %v445
        %v454 = vpack.c.b16 %v446, %v446
        %v455 = vpack.c.b16 %v447, %v447
        %v456 = vpack.c.b16 %v448, %v448
        %465 = vst [vmem:[%s230] sm:$0xf] %v449
        %466 = vst [vmem:[%s230 + $0x4] sm:$0xf] %v450
        %467 = vst [vmem:[%s230 + $0x8] sm:$0xf] %v451
        %468 = vst [vmem:[%s230 + $0xc] sm:$0xf] %v452
        %469 = vst [vmem:[%s230 + $0x10] sm:$0xf] %v453
        %470 = vst [vmem:[%s230 + $0x14] sm:$0xf] %v454
        %471 = vst [vmem:[%s230 + $0x18] sm:$0xf] %v455
        %472 = vst [vmem:[%s230 + $0x1c] sm:$0xf] %v456
        %s473 = sand.u32 %s119, 1
        %s474 = scalar_lea.sflag [#allocation4], %s473
        %s475 = sand.u32 %s119, 1
        %s476 = smul.addr %s475, 32
        %s477 = scalar_lea.vmem [#allocation7], %s476
        // Predicated region
        $region45: #{tpu_custom_call.1} parent=35 // pred_check
          %p478 = pneg %p129
        $region46: #{tpu_custom_call.1} parent=35 // pred_check_branch
          %480 = sbr.rel (%p478) target = $region48
        $region47: #{tpu_custom_call.1} parent=35 // pred_region
          %s481 = smul.u32 8, %s22
          %s483 = ssub.s32 512, 512
          %484 = vsyncadd %s474, %s483
          %s485 = smul.addr %s481, 64
          %s486 = scalar_lea.hbm %s4, %s485
          %s487 = sshll.u32 %s477, 4
          %s488 = int_to_ptr.vmem [resolvable:$true] %s487
          %493 = dma.vmem_to_hbm [thread:$0]  %s488, 512, %s486, %s474, 64, 64, 4
        $region48: #{tpu_custom_call.1} parent=35 // pred_fallthru
          _
      $region36: #{tpu_custom_call.1} parent=5 // pred_fallthru
        _
      %p494 = scmp.le.s32.totalorder 2, %s17
      // Predicated region
      $region49: #{tpu_custom_call.1} parent=5 // pred_check
        %p495 = pneg %p494
      $region50: #{tpu_custom_call.1} parent=5 // pred_check_branch
        %497 = sbr.rel (%p495) target = $region52
      $region51: #{tpu_custom_call.1} parent=5 // pred_region
        %s498 = ssub.s32 %s17, 2
        // Predicated region
        $region53: #{tpu_custom_call.1} parent=51 // pred_check
          %p499 = pneg %p135
        $region54: #{tpu_custom_call.1} parent=51 // pred_check_branch
          %501 = sbr.rel (%p499) target = $region56
        $region55: #{tpu_custom_call.1} parent=51 // pred_region
          %s502 = sand.u32 %s120, 1
          %s503 = scalar_lea.sflag [#allocation4], %s502
          %s504 = sand.u32 %s120, 1
          %s505 = smul.addr %s504, 32
          %s506 = scalar_lea.vmem [#allocation7], %s505
          %507 = dma.done %s503, 512
        $region56: #{tpu_custom_call.1} parent=51 // pred_fallthru
          _
      $region52: #{tpu_custom_call.1} parent=5 // pred_fallthru
        _
    $region6: #{tpu_custom_call.1} parent=1 // loop_footer
      %s21 = sadd.s32 1, %s17
    $region7: #{tpu_custom_call.1} parent=1 // loop_footer_branch
      %16 = sbr.rel target = $region3
    $region8: #{tpu_custom_call.1} parent=1 // loop_exit
      _
    %508 = vsyncpa [#allocation3], 1
    %s509 = scalar_lea.sflag [#allocation3], 1
    %510 = vsyncpa %s509, 1
    %511 = vsyncpa [#allocation6], 1
    %512 = vsyncpa [#allocation4], 1
    %s513 = scalar_lea.sflag [#allocation4], 1
    %514 = vsyncpa %s513, 1

</llo_original>
